<compile_context>
chip_gen: v5e
topology: v5e:2x2
jax: 0.10.0
libtpu: 0.0.40
codegen_flags: <defaults>
</compile_context>

<pallas_src>
import jax
import jax.numpy as jnp
from jax.experimental import pallas as pl
from jax.experimental.pallas import tpu as pltpu

IN_DIM = 28 * 28     # 784
H1 = 128
H2 = 64              # logical hidden width (padded to 128 lanes in-kernel)
OUT = 10             # logical output width (kept narrow for the writeback)
LANES = 128


def _round_up(n, m):
    return ((n + m - 1) // m) * m


def _choose_tile(B, max_tile):
    """Pick (tile_b, B_pad) with tile_b | B_pad and bounded padding.

    - If B fits in one tile: a single exact block (<=7 pad rows), grid = 1.
    - Otherwise: pad B to a multiple of 256 (<=255 wasted rows) and take the
      largest divisor tile <= max_tile that is a multiple of 256.  Large B
      therefore naturally yields a grid >= 2 (feeds both TCs on v7x).
    """
    b8 = _round_up(B, 8)
    if b8 <= max_tile:
        return b8, b8
    b_pad = _round_up(B, 256)
    n = b_pad // 256
    best = 1
    for d in range(1, n + 1):
        if n % d == 0 and d * 256 <= max_tile:
            best = d
    return best * 256, b_pad


def _make_mlp_kernel(n_sub, sub_m, unroll):
    """Kernel for one (tile_b, 784) batch block, processed in `n_sub`
    sub-tiles of `sub_m` rows each (bounds f32 intermediate size)."""

    def kernel(x_ref, w1_ref, b1_ref, w2_ref, b2_ref, w3_ref, b3_ref, o_ref):
        # Hoist loop-invariant reads out of the sub-tile loop (avoids
        # re-emitted loads / broadcasts in the unrolled chain).
        w1 = w1_ref[...]          # bf16 (784, 128)
        w2 = w2_ref[...]          # bf16 (128, 128)  (cols 64..127 are zero)
        w3 = w3_ref[...]          # bf16 (128, 10)   (rows 64..127 are zero)
        b1 = b1_ref[...]          # f32  (1, 128)
        b2 = b2_ref[...]          # f32  (1, 128)
        b3 = b3_ref[...]          # f32  (1, 10)

        def sub_tile(row):
            # Fused input cast: read incoming dtype, cast to bf16 in VMEM.
            x = x_ref[pl.ds(row, sub_m), :].astype(jnp.bfloat16)    # (sub_m, 784)
            h1 = jnp.dot(x, w1, preferred_element_type=jnp.float32) + b1
            h1 = jnp.maximum(h1, 0.0).astype(jnp.bfloat16)
            h2 = jnp.dot(h1, w2, preferred_element_type=jnp.float32) + b2
            h2 = jnp.maximum(h2, 0.0).astype(jnp.bfloat16)
            out = jnp.dot(h2, w3, preferred_element_type=jnp.float32) + b3
            o_ref[pl.ds(row, sub_m), :] = out                       # f32 (sub_m, 10)

        if n_sub == 1:
            sub_tile(0)
        else:
            def body(s, carry):
                sub_tile(pl.multiple_of(s * sub_m, sub_m))
                return carry
            jax.lax.fori_loop(0, n_sub, body, 0, unroll=unroll)

    return kernel


def simple_nn_forward(x_nchw, params, *, max_tile_b=1024):
    """Forward pass matching SimpleNN.forward.

    x_nchw: (B, 1, 28, 28) float32 (NCHW).
    params: dict with w1 (784,128), b1 (128,), w2 (128,64), b2 (64,),
            w3 (64,10), b3 (10,)  -- weights already (in, out).
    Returns logits of shape (B, 10), float32.
    """
    B = x_nchw.shape[0]
    # Pure reshape (row-major, same as torch x.view(-1, 784)); NO dtype cast
    # here -- the f32 -> bf16 cast is fused into the kernel.
    x = x_nchw.reshape(B, IN_DIM)

    tile_b, B_pad = _choose_tile(B, max_tile_b)
    if B_pad != B:
        x = jnp.pad(x, ((0, B_pad - B), (0, 0)))

    # Cap per-MXU-call M at 256 rows; cap the unroll of the sub-tile loop at 4.
    sub_m = 256 if tile_b % 256 == 0 else tile_b
    n_sub = tile_b // sub_m
    unroll = min(n_sub, 4)

    # Lane-dense bf16 weights.  Hidden width 64 is zero-padded to 128 lanes
    # (bit-equivalent math); the OUTPUT dim stays narrow (10) so the logits
    # writeback is only 40 B/row.  Biases stay f32.
    w1 = params["w1"].astype(jnp.bfloat16)                                    # (784, 128)
    b1 = params["b1"].reshape(1, -1).astype(jnp.float32)                      # (1, 128)
    w2 = jnp.pad(params["w2"], ((0, 0), (0, LANES - H2))).astype(jnp.bfloat16)   # (128, 128)
    b2 = jnp.pad(params["b2"], (0, LANES - H2)).reshape(1, -1).astype(jnp.float32)
    w3 = jnp.pad(params["w3"], ((0, LANES - H2), (0, 0))).astype(jnp.bfloat16)   # (128, 10)
    b3 = params["b3"].reshape(1, -1).astype(jnp.float32)                      # (1, 10)

    resident = lambda shape: pl.BlockSpec(shape, lambda i: (0, 0))  # stays in VMEM

    grid = (B_pad // tile_b,)
    in_itemsize = jnp.dtype(x.dtype).itemsize

    flops = 2 * B_pad * (IN_DIM * H1 + H1 * LANES + LANES * OUT)
    bytes_accessed = int(
        B_pad * IN_DIM * in_itemsize
        + (w1.size + w2.size + w3.size) * 2
        + (b1.size + b2.size + b3.size) * 4
        + B_pad * OUT * 4)

    # Estimated VMEM: double-buffered x tile (lane-padded 784 -> 896) and
    # output tile (lane-padded 10 -> 128), plus (double-buffered) weights.
    vmem_est = (2 * tile_b * _round_up(IN_DIM, LANES) * in_itemsize
                + 2 * tile_b * LANES * 4
                + 2 * (w1.size + w2.size + w3.size) * 2
                + 2 * 3 * 8 * LANES * 4)
    # Only raise the scoped-VMEM limit when the tile actually needs it
    # (v5e default is 16 MiB; v6e/v7x defaults are 32 MiB).
    vmem_limit = int(vmem_est * 1.25) if vmem_est > 14 * 2**20 else None

    out = pl.pallas_call(
        _make_mlp_kernel(n_sub, sub_m, unroll),
        out_shape=jax.ShapeDtypeStruct((B_pad, OUT), jnp.float32),
        grid=grid,
        in_specs=[
            pl.BlockSpec((tile_b, IN_DIM), lambda i: (i, 0)),   # x: pipelined per tile
            resident((IN_DIM, H1)), resident((1, H1)),
            resident((LANES, LANES)), resident((1, LANES)),
            resident((LANES, OUT)), resident((1, OUT)),
        ],
        out_specs=pl.BlockSpec((tile_b, OUT), lambda i: (i, 0)),   # narrow f32 logits
        compiler_params=pltpu.CompilerParams(
            dimension_semantics=("parallel",),                     # megacore on v7x
            vmem_limit_bytes=vmem_limit),
        cost_estimate=pl.CostEstimate(flops=int(flops), transcendentals=0,
                                      bytes_accessed=bytes_accessed),
    )(x, w1, b1, w2, b2, w3, b3)

    return out[:B] if B_pad != B else out


def init_params(key):
    """Deterministic init mimicking torch.nn.Linear defaults:
    U(-1/sqrt(fan_in), 1/sqrt(fan_in)) for both weight and bias.
    Weights stored as (in_features, out_features)."""
    dims = [(IN_DIM, H1), (H1, H2), (H2, OUT)]
    params = {}
    for i, (fan_in, fan_out) in enumerate(dims, start=1):
        key, kw, kb = jax.random.split(key, 3)
        bound = 1.0 / jnp.sqrt(jnp.float32(fan_in))
        params[f"w{i}"] = jax.random.uniform(
            kw, (fan_in, fan_out), jnp.float32, minval=-bound, maxval=bound)
        params[f"b{i}"] = jax.random.uniform(
            kb, (fan_out,), jnp.float32, minval=-bound, maxval=bound)
    return params


if __name__ == "__main__":
    key = jax.random.PRNGKey(0)
    key, kx = jax.random.split(key)

    # Small MNIST-like batch: (B, C, H, W) = (8, 1, 28, 28), NCHW.
    x = jax.random.normal(kx, (8, 1, 28, 28), dtype=jnp.float32)
    params = init_params(key)

    logits = simple_nn_forward(x, params)
    jax.block_until_ready(logits)
    assert logits.shape == (8, 10)
    assert logits.dtype == jnp.float32

    # Reference in plain JAX with the same mixed precision (bf16 inputs/weights,
    # f32 accumulation) -- should match the kernel closely.
    xf = x.reshape(x.shape[0], -1).astype(jnp.bfloat16)
    w1b = params["w1"].astype(jnp.bfloat16)
    w2b = params["w2"].astype(jnp.bfloat16)
    w3b = params["w3"].astype(jnp.bfloat16)
    h1 = jnp.maximum(
        jnp.dot(xf, w1b, preferred_element_type=jnp.float32) + params["b1"], 0.0)
    h2 = jnp.maximum(
        jnp.dot(h1.astype(jnp.bfloat16), w2b,
                preferred_element_type=jnp.float32) + params["b2"], 0.0)
    ref_mixed = jnp.dot(h2.astype(jnp.bfloat16), w3b,
                        preferred_element_type=jnp.float32) + params["b3"]
    assert jnp.allclose(logits, ref_mixed, atol=2e-3, rtol=1e-2)

    # Loose sanity check against a full-f32 reference (bf16 rounding only).
    # TODO(synk): bf16 MXU math intentionally deviates from full-f32 PyTorch;
    # keep weights f32 in-kernel if bit-parity with SimpleNN is required.
    h1f = jnp.maximum(x.reshape(8, -1) @ params["w1"] + params["b1"], 0.0)
    h2f = jnp.maximum(h1f @ params["w2"] + params["b2"], 0.0)
    ref_f32 = h2f @ params["w3"] + params["b3"]
    assert jnp.allclose(logits, ref_f32, atol=1e-1, rtol=1e-1)

    print("KERNEL_OK")
</pallas_src>

<mosaic_0001>
module attributes {stable_mosaic.version = 11 : i64} {
  func.func @kernel(%arg0: i32, %arg1: memref<8x784xf32, #tpu.memory_space<vmem>>, %arg2: memref<784x128xbf16, #tpu.memory_space<vmem>>, %arg3: memref<1x128xf32, #tpu.memory_space<vmem>>, %arg4: memref<128x128xbf16, #tpu.memory_space<vmem>>, %arg5: memref<1x128xf32, #tpu.memory_space<vmem>>, %arg6: memref<128x10xbf16, #tpu.memory_space<vmem>>, %arg7: memref<1x10xf32, #tpu.memory_space<vmem>>, %arg8: memref<8x10xf32, #tpu.memory_space<vmem>>) attributes {dimension_semantics = [#tpu.dimension_semantics<parallel>], iteration_bounds = array<i64: 1>, scalar_prefetch = 0 : i64, scratch_operands = 0 : i64, tpu.core_type = #tpu.core_type<tc>, window_params = [{transform_indices = @transform_0, window_bounds = array<i64: 8, 784>}, {pipeline_mode = #tpu.pipeline_mode<synchronous>, transform_indices = @transform_1, window_bounds = array<i64: 784, 128>}, {pipeline_mode = #tpu.pipeline_mode<synchronous>, transform_indices = @transform_2, window_bounds = array<i64: 1, 128>}, {pipeline_mode = #tpu.pipeline_mode<synchronous>, transform_indices = @transform_3, window_bounds = array<i64: 128, 128>}, {pipeline_mode = #tpu.pipeline_mode<synchronous>, transform_indices = @transform_4, window_bounds = array<i64: 1, 128>}, {pipeline_mode = #tpu.pipeline_mode<synchronous>, transform_indices = @transform_5, window_bounds = array<i64: 128, 10>}, {pipeline_mode = #tpu.pipeline_mode<synchronous>, transform_indices = @transform_6, window_bounds = array<i64: 1, 10>}, {transform_indices = @transform_7, window_bounds = array<i64: 8, 10>}]} {
    %c0 = arith.constant 0 : index
    %c0_0 = arith.constant 0 : index
    %0 = vector.load %arg2[%c0, %c0_0] : memref<784x128xbf16, #tpu.memory_space<vmem>>, vector<784x128xbf16>
    %c0_1 = arith.constant 0 : index
    %c0_2 = arith.constant 0 : index
    %1 = vector.load %arg4[%c0_1, %c0_2] : memref<128x128xbf16, #tpu.memory_space<vmem>>, vector<128x128xbf16>
    %c0_3 = arith.constant 0 : index
    %c0_4 = arith.constant 0 : index
    %2 = vector.load %arg6[%c0_3, %c0_4] : memref<128x10xbf16, #tpu.memory_space<vmem>>, vector<128x10xbf16>
    %c0_5 = arith.constant 0 : index
    %c0_6 = arith.constant 0 : index
    %3 = vector.load %arg3[%c0_5, %c0_6] : memref<1x128xf32, #tpu.memory_space<vmem>>, vector<1x128xf32>
    %c0_7 = arith.constant 0 : index
    %c0_8 = arith.constant 0 : index
    %4 = vector.load %arg5[%c0_7, %c0_8] : memref<1x128xf32, #tpu.memory_space<vmem>>, vector<1x128xf32>
    %c0_9 = arith.constant 0 : index
    %c0_10 = arith.constant 0 : index
    %5 = vector.load %arg7[%c0_9, %c0_10] : memref<1x10xf32, #tpu.memory_space<vmem>>, vector<1x10xf32>
    %c0_11 = arith.constant 0 : index
    %c0_12 = arith.constant 0 : index
    %6 = vector.load %arg1[%c0_11, %c0_12] : memref<8x784xf32, #tpu.memory_space<vmem>>, vector<8x784xf32>
    %7 = arith.truncf %6 : vector<8x784xf32> to vector<8x784xbf16>
    %cst = arith.constant dense<0.000000e+00> : vector<8x128xf32>
    %8 = tpu.matmul %7, %0, %cst {dimension_numbers = #tpu.dot_dimension_numbers<[1], [0], [0], [1], [0, 0, 1, 1], [], []>} : vector<8x784xbf16>, vector<784x128xbf16>, vector<8x128xf32> -> vector<8x128xf32>
    %9 = vector.broadcast %3 : vector<1x128xf32> to vector<8x128xf32>
    %10 = arith.addf %8, %9 : vector<8x128xf32>
    %cst_13 = arith.constant 0.000000e+00 : f32
    %11 = vector.broadcast %cst_13 : f32 to vector<8x128xf32>
    %12 = arith.maximumf %10, %11 : vector<8x128xf32>
    %13 = arith.truncf %12 : vector<8x128xf32> to vector<8x128xbf16>
    %cst_14 = arith.constant dense<0.000000e+00> : vector<8x128xf32>
    %14 = tpu.matmul %13, %1, %cst_14 {dimension_numbers = #tpu.dot_dimension_numbers<[1], [0], [0], [1], [0, 0, 1, 1], [], []>} : vector<8x128xbf16>, vector<128x128xbf16>, vector<8x128xf32> -> vector<8x128xf32>
    %15 = vector.broadcast %4 : vector<1x128xf32> to vector<8x128xf32>
    %16 = arith.addf %14, %15 : vector<8x128xf32>
    %cst_15 = arith.constant 0.000000e+00 : f32
    %17 = vector.broadcast %cst_15 : f32 to vector<8x128xf32>
    %18 = arith.maximumf %16, %17 : vector<8x128xf32>
    %19 = arith.truncf %18 : vector<8x128xf32> to vector<8x128xbf16>
    %cst_16 = arith.constant dense<0.000000e+00> : vector<8x10xf32>
    %20 = tpu.matmul %19, %2, %cst_16 {dimension_numbers = #tpu.dot_dimension_numbers<[1], [0], [0], [1], [0, 0, 1, 1], [], []>} : vector<8x128xbf16>, vector<128x10xbf16>, vector<8x10xf32> -> vector<8x10xf32>
    %21 = vector.broadcast %5 : vector<1x10xf32> to vector<8x10xf32>
    %22 = arith.addf %20, %21 : vector<8x10xf32>
    %c0_17 = arith.constant 0 : index
    %c0_18 = arith.constant 0 : index
    %23 = vector.load %arg8[%c0_17, %c0_18] : memref<8x10xf32, #tpu.memory_space<vmem>>, vector<8x10xf32>
    tpu.vector_store %arg8[%c0_17, %c0_18], %22 {strides = array<i32>} : memref<8x10xf32, #tpu.memory_space<vmem>>, vector<8x10xf32>,
    return
  }
  func.func @transform_0(%arg0: i32) -> (i32, i32) {
    %c0_i32 = arith.constant 0 : i32
    %c0_i32_0 = arith.constant 0 : i32
    return %arg0, %c0_i32 : i32, i32
  }
  func.func @transform_1(%arg0: i32) -> (i32, i32) {
    %c0_i32 = arith.constant 0 : i32
    %c0_i32_0 = arith.constant 0 : i32
    %c0_i32_1 = arith.constant 0 : i32
    return %c0_i32, %c0_i32_0 : i32, i32
  }
  func.func @transform_2(%arg0: i32) -> (i32, i32) {
    %c0_i32 = arith.constant 0 : i32
    %c0_i32_0 = arith.constant 0 : i32
    %c0_i32_1 = arith.constant 0 : i32
    return %c0_i32, %c0_i32_0 : i32, i32
  }
  func.func @transform_3(%arg0: i32) -> (i32, i32) {
    %c0_i32 = arith.constant 0 : i32
    %c0_i32_0 = arith.constant 0 : i32
    %c0_i32_1 = arith.constant 0 : i32
    return %c0_i32, %c0_i32_0 : i32, i32
  }
  func.func @transform_4(%arg0: i32) -> (i32, i32) {
    %c0_i32 = arith.constant 0 : i32
    %c0_i32_0 = arith.constant 0 : i32
    %c0_i32_1 = arith.constant 0 : i32
    return %c0_i32, %c0_i32_0 : i32, i32
  }
  func.func @transform_5(%arg0: i32) -> (i32, i32) {
    %c0_i32 = arith.constant 0 : i32
    %c0_i32_0 = arith.constant 0 : i32
    %c0_i32_1 = arith.constant 0 : i32
    return %c0_i32, %c0_i32_0 : i32, i32
  }
  func.func @transform_6(%arg0: i32) -> (i32, i32) {
    %c0_i32 = arith.constant 0 : i32
    %c0_i32_0 = arith.constant 0 : i32
    %c0_i32_1 = arith.constant 0 : i32
    return %c0_i32, %c0_i32_0 : i32, i32
  }
  func.func @transform_7(%arg0: i32) -> (i32, i32) {
    %c0_i32 = arith.constant 0 : i32
    %c0_i32_0 = arith.constant 0 : i32
    return %arg0, %c0_i32 : i32, i32
  }
}

</mosaic_0001>

<llo_original>
// kernel: tpu_custom_call.1
$region0: #{tpu_custom_call.1}
  #allocation0 [shape = 'u32[]', space=smem, size = 0x4, offset = 0x4, fixed_abs, tag = 'smem constant byte address 0x4 - core index']
  #allocation1 [shape = 'u32[72,128]{1,0:T(1,128)}', space=vmem, size = 0x9000, scoped, tag = 'internal scratch']
  %s0 = inlined_call_operand.hbm [shape: f32[8,784], index: 0, kind: input, shape index: {}]
  %s1 = inlined_call_operand.hbm [shape: bf16[784,128], index: 1, kind: input, shape index: {}]
  %s2 = inlined_call_operand.vmem [shape: f32[1,128], index: 2, kind: input, shape index: {}]
  %s3 = inlined_call_operand.vmem [shape: bf16[128,128], index: 3, kind: input, shape index: {}]
  %s4 = inlined_call_operand.vmem [shape: f32[1,128], index: 4, kind: input, shape index: {}]
  %s5 = inlined_call_operand.vmem [shape: bf16[128,10], index: 5, kind: input, shape index: {}]
  %s6 = inlined_call_operand.vmem [shape: f32[1,10], index: 6, kind: input, shape index: {}]
  %s7 = inlined_call_operand.hbm [shape: f32[8,10], index: 7, kind: output, shape index: {}]
  %s8 = sld [smem:[#allocation0]]
  $region46: #{tpu_custom_call.1} parent=0
    _
  %s10 = ssub.s32 1, %s8
  %s11 = scalar_select 0, %s10, %s8
  $region1: #{tpu_custom_call.1} parent=0
    #allocation2 [shape = 'u8[28672]{0}', space=vmem, size = 0x7000, scoped, tag = 'input window, operand 0, single buffered']
    #allocation3 [shape = 's32[1]{0}', space=sflag, size = 0x4, scoped, tag = 'scoped memory for tpu_custom_call.1']
    #allocation4 [shape = 's32[1]{0}', space=sflag, size = 0x4, scoped, tag = 'scoped memory for tpu_custom_call.1']
    #allocation5 [shape = 'u8[200704]{0}', space=vmem, size = 0x31000, scoped, tag = 'input window, operand 1, single buffered']
    #allocation6 [shape = 's32[1]{0}', space=sflag, size = 0x4, scoped, tag = 'scoped memory for tpu_custom_call.1']
    #allocation7 [shape = 'u8[4096]{0}', space=vmem, size = 0x1000, scoped, tag = 'output window, operand 0, single buffered']
    %12 = vsyncpa [#allocation3], 0
    %13 = vsyncpa [#allocation6], 0
    %14 = vsyncpa [#allocation4], 0
    // Predicated region
    $region2: #{tpu_custom_call.1} parent=1 // pred_check
      _
    $region3: #{tpu_custom_call.1} parent=1 // pred_check_branch
      %16 = sbr.rel (0) target = $region5
    $region4: #{tpu_custom_call.1} parent=1 // pred_region
      %18 = vsyncadd [#allocation3], 0
      %s20 = sshll.u32 %s0, 4
      %s21 = int_to_ptr.hbm [resolvable:$true] %s20
      %s22 = sshll.u32 [#allocation2], 4
      %s23 = int_to_ptr.vmem [resolvable:$true] %s22
      %25 = dma.hbm_to_vmem [thread:$0]  %s21, 896, %s23, [#allocation3]
    $region5: #{tpu_custom_call.1} parent=1 // pred_fallthru
      _
    // Predicated region
    $region6: #{tpu_custom_call.1} parent=1 // pred_check
      _
    $region7: #{tpu_custom_call.1} parent=1 // pred_check_branch
      %27 = sbr.rel (0) target = $region9
    $region8: #{tpu_custom_call.1} parent=1 // pred_region
      %29 = vsyncadd [#allocation6], 0
      %s30 = sshll.u32 %s1, 4
      %s31 = int_to_ptr.hbm [resolvable:$true] %s30
      %s32 = sshll.u32 [#allocation5], 4
      %s33 = int_to_ptr.vmem [resolvable:$true] %s32
      %38 = dma.hbm_to_vmem [thread:$0]  %s31, 6272, %s33, [#allocation6], 64, 64, 4
    $region9: #{tpu_custom_call.1} parent=1 // pred_fallthru
      _
    // Predicated region
    $region10: #{tpu_custom_call.1} parent=1 // pred_check
      _
    $region11: #{tpu_custom_call.1} parent=1 // pred_check_branch
      %40 = sbr.rel (0) target = $region13
    $region12: #{tpu_custom_call.1} parent=1 // pred_region
      _
    $region13: #{tpu_custom_call.1} parent=1 // pred_fallthru
      _
    // Predicated region
    $region14: #{tpu_custom_call.1} parent=1 // pred_check
      _
    $region15: #{tpu_custom_call.1} parent=1 // pred_check_branch
      %42 = sbr.rel (0) target = $region17
    $region16: #{tpu_custom_call.1} parent=1 // pred_region
      _
    $region17: #{tpu_custom_call.1} parent=1 // pred_fallthru
      _
    // Predicated region
    $region18: #{tpu_custom_call.1} parent=1 // pred_check
      _
    $region19: #{tpu_custom_call.1} parent=1 // pred_check_branch
      %44 = sbr.rel (0) target = $region21
    $region20: #{tpu_custom_call.1} parent=1 // pred_region
      _
    $region21: #{tpu_custom_call.1} parent=1 // pred_fallthru
      _
    // Predicated region
    $region22: #{tpu_custom_call.1} parent=1 // pred_check
      _
    $region23: #{tpu_custom_call.1} parent=1 // pred_check_branch
      %46 = sbr.rel (0) target = $region25
    $region24: #{tpu_custom_call.1} parent=1 // pred_region
      _
    $region25: #{tpu_custom_call.1} parent=1 // pred_fallthru
      _
    // Predicated region
    $region26: #{tpu_custom_call.1} parent=1 // pred_check
      _
    $region27: #{tpu_custom_call.1} parent=1 // pred_check_branch
      %48 = sbr.rel (0) target = $region29
    $region28: #{tpu_custom_call.1} parent=1 // pred_region
      _
    $region29: #{tpu_custom_call.1} parent=1 // pred_fallthru
      _
    // Predicated region
    $region30: #{tpu_custom_call.1} parent=1 // pred_check
      _
    $region31: #{tpu_custom_call.1} parent=1 // pred_check_branch
      %50 = sbr.rel (0) target = $region33
    $region32: #{tpu_custom_call.1} parent=1 // pred_region
      %52 = dma.done [#allocation3], 896
    $region33: #{tpu_custom_call.1} parent=1 // pred_fallthru
      _
    // Predicated region
    $region34: #{tpu_custom_call.1} parent=1 // pred_check
      _
    $region35: #{tpu_custom_call.1} parent=1 // pred_check_branch
      %54 = sbr.rel (0) target = $region37
    $region36: #{tpu_custom_call.1} parent=1 // pred_region
      %56 = dma.done [#allocation6], 6272
    $region37: #{tpu_custom_call.1} parent=1 // pred_fallthru
      _
    %v58 = vld [vmem:[#allocation5] sm:$0xf]
    %v59 = vld [vmem:[#allocation5 + $0x4] sm:$0xf]
    %v60 = vld [vmem:[#allocation5 + $0x8] sm:$0xf]
    %v61 = vld [vmem:[#allocation5 + $0xc] sm:$0xf]
    %v62 = vld [vmem:[#allocation5 + $0x10] sm:$0xf]
    %v63 = vld [vmem:[#allocation5 + $0x14] sm:$0xf]
    %v64 = vld [vmem:[#allocation5 + $0x18] sm:$0xf]
    %v65 = vld [vmem:[#allocation5 + $0x1c] sm:$0xf]
    %v66 = vld [vmem:[#allocation5 + $0x20] sm:$0xf]
    %v67 = vld [vmem:[#allocation5 + $0x24] sm:$0xf]
    %v68 = vld [vmem:[#allocation5 + $0x28] sm:$0xf]
    %v69 = vld [vmem:[#allocation5 + $0x2c] sm:$0xf]
    %v70 = vld [vmem:[#allocation5 + $0x30] sm:$0xf]
    %v71 = vld [vmem:[#allocation5 + $0x34] sm:$0xf]
    %v72 = vld [vmem:[#allocation5 + $0x38] sm:$0xf]
    %v73 = vld [vmem:[#allocation5 + $0x3c] sm:$0xf]
    %v74 = vld [vmem:[#allocation5 + $0x40] sm:$0xf]
    %v75 = vld [vmem:[#allocation5 + $0x44] sm:$0xf]
    %v76 = vld [vmem:[#allocation5 + $0x48] sm:$0xf]
    %v77 = vld [vmem:[#allocation5 + $0x4c] sm:$0xf]
    %v78 = vld [vmem:[#allocation5 + $0x50] sm:$0xf]
    %v79 = vld [vmem:[#allocation5 + $0x54] sm:$0xf]
    %v80 = vld [vmem:[#allocation5 + $0x58] sm:$0xf]
    %v81 = vld [vmem:[#allocation5 + $0x5c] sm:$0xf]
    %v82 = vld [vmem:[#allocation5 + $0x60] sm:$0xf]
    %v83 = vld [vmem:[#allocation5 + $0x64] sm:$0xf]
    %v84 = vld [vmem:[#allocation5 + $0x68] sm:$0xf]
    %v85 = vld [vmem:[#allocation5 + $0x6c] sm:$0xf]
    %v86 = vld [vmem:[#allocation5 + $0x70] sm:$0xf]
    %v87 = vld [vmem:[#allocation5 + $0x74] sm:$0xf]
    %v88 = vld [vmem:[#allocation5 + $0x78] sm:$0xf]
    %v89 = vld [vmem:[#allocation5 + $0x7c] sm:$0xf]
    %v90 = vld [vmem:[#allocation5 + $0x80] sm:$0xf]
    %v91 = vld [vmem:[#allocation5 + $0x84] sm:$0xf]
    %v92 = vld [vmem:[#allocation5 + $0x88] sm:$0xf]
    %v93 = vld [vmem:[#allocation5 + $0x8c] sm:$0xf]
    %v94 = vld [vmem:[#allocation5 + $0x90] sm:$0xf]
    %v95 = vld [vmem:[#allocation5 + $0x94] sm:$0xf]
    %v96 = vld [vmem:[#allocation5 + $0x98] sm:$0xf]
    %v97 = vld [vmem:[#allocation5 + $0x9c] sm:$0xf]
    %v98 = vld [vmem:[#allocation5 + $0xa0] sm:$0xf]
    %v99 = vld [vmem:[#allocation5 + $0xa4] sm:$0xf]
    %v100 = vld [vmem:[#allocation5 + $0xa8] sm:$0xf]
    %v101 = vld [vmem:[#allocation5 + $0xac] sm:$0xf]
    %v102 = vld [vmem:[#allocation5 + $0xb0] sm:$0xf]
    %v103 = vld [vmem:[#allocation5 + $0xb4] sm:$0xf]
    %v104 = vld [vmem:[#allocation5 + $0xb8] sm:$0xf]
    %v105 = vld [vmem:[#allocation5 + $0xbc] sm:$0xf]
    %v106 = vld [vmem:[#allocation5 + $0xc0] sm:$0xf]
    %v107 = vld [vmem:[#allocation5 + $0xc4] sm:$0xf]
    %v108 = vld [vmem:[#allocation5 + $0xc8] sm:$0xf]
    %v109 = vld [vmem:[#allocation5 + $0xcc] sm:$0xf]
    %v110 = vld [vmem:[#allocation5 + $0xd0] sm:$0xf]
    %v111 = vld [vmem:[#allocation5 + $0xd4] sm:$0xf]
    %v112 = vld [vmem:[#allocation5 + $0xd8] sm:$0xf]
    %v113 = vld [vmem:[#allocation5 + $0xdc] sm:$0xf]
    %v114 = vld [vmem:[#allocation5 + $0xe0] sm:$0xf]
    %v115 = vld [vmem:[#allocation5 + $0xe4] sm:$0xf]
    %v116 = vld [vmem:[#allocation5 + $0xe8] sm:$0xf]
    %v117 = vld [vmem:[#allocation5 + $0xec] sm:$0xf]
    %v118 = vld [vmem:[#allocation5 + $0xf0] sm:$0xf]
    %v119 = vld [vmem:[#allocation5 + $0xf4] sm:$0xf]
    %v120 = vld [vmem:[#allocation5 + $0xf8] sm:$0xf]
    %v121 = vld [vmem:[#allocation5 + $0xfc] sm:$0xf]
    %v122 = vld [vmem:[#allocation5 + $0x100] sm:$0xf]
    %v123 = vld [vmem:[#allocation5 + $0x104] sm:$0xf]
    %v124 = vld [vmem:[#allocation5 + $0x108] sm:$0xf]
    %v125 = vld [vmem:[#allocation5 + $0x10c] sm:$0xf]
    %v126 = vld [vmem:[#allocation5 + $0x110] sm:$0xf]
    %v127 = vld [vmem:[#allocation5 + $0x114] sm:$0xf]
    %v128 = vld [vmem:[#allocation5 + $0x118] sm:$0xf]
    %v129 = vld [vmem:[#allocation5 + $0x11c] sm:$0xf]
    %v130 = vld [vmem:[#allocation5 + $0x120] sm:$0xf]
    %v131 = vld [vmem:[#allocation5 + $0x124] sm:$0xf]
    %v132 = vld [vmem:[#allocation5 + $0x128] sm:$0xf]
    %v133 = vld [vmem:[#allocation5 + $0x12c] sm:$0xf]
    %v134 = vld [vmem:[#allocation5 + $0x130] sm:$0xf]
    %v135 = vld [vmem:[#allocation5 + $0x134] sm:$0xf]
    %v136 = vld [vmem:[#allocation5 + $0x138] sm:$0xf]
    %v137 = vld [vmem:[#allocation5 + $0x13c] sm:$0xf]
    %v138 = vld [vmem:[#allocation5 + $0x140] sm:$0xf]
    %v139 = vld [vmem:[#allocation5 + $0x144] sm:$0xf]
    %v140 = vld [vmem:[#allocation5 + $0x148] sm:$0xf]
    %v141 = vld [vmem:[#allocation5 + $0x14c] sm:$0xf]
    %v142 = vld [vmem:[#allocation5 + $0x150] sm:$0xf]
    %v143 = vld [vmem:[#allocation5 + $0x154] sm:$0xf]
    %v144 = vld [vmem:[#allocation5 + $0x158] sm:$0xf]
    %v145 = vld [vmem:[#allocation5 + $0x15c] sm:$0xf]
    %v146 = vld [vmem:[#allocation5 + $0x160] sm:$0xf]
    %v147 = vld [vmem:[#allocation5 + $0x164] sm:$0xf]
    %v148 = vld [vmem:[#allocation5 + $0x168] sm:$0xf]
    %v149 = vld [vmem:[#allocation5 + $0x16c] sm:$0xf]
    %v150 = vld [vmem:[#allocation5 + $0x170] sm:$0xf]
    %v151 = vld [vmem:[#allocation5 + $0x174] sm:$0xf]
    %v152 = vld [vmem:[#allocation5 + $0x178] sm:$0xf]
    %v153 = vld [vmem:[#allocation5 + $0x17c] sm:$0xf]
    %v154 = vld [vmem:[#allocation5 + $0x180] sm:$0xf]
    %v155 = vld [vmem:[#allocation5 + $0x184] sm:$0xf]
    %v156 = vld [vmem:[%s3] sm:$0xf]
    %v157 = vld [vmem:[%s3 + $0x4] sm:$0xf]
    %v158 = vld [vmem:[%s3 + $0x8] sm:$0xf]
    %v159 = vld [vmem:[%s3 + $0xc] sm:$0xf]
    %v160 = vld [vmem:[%s3 + $0x10] sm:$0xf]
    %v161 = vld [vmem:[%s3 + $0x14] sm:$0xf]
    %v162 = vld [vmem:[%s3 + $0x18] sm:$0xf]
    %v163 = vld [vmem:[%s3 + $0x1c] sm:$0xf]
    %v164 = vld [vmem:[%s3 + $0x20] sm:$0xf]
    %v165 = vld [vmem:[%s3 + $0x24] sm:$0xf]
    %v166 = vld [vmem:[%s3 + $0x28] sm:$0xf]
    %v167 = vld [vmem:[%s3 + $0x2c] sm:$0xf]
    %v168 = vld [vmem:[%s3 + $0x30] sm:$0xf]
    %v169 = vld [vmem:[%s3 + $0x34] sm:$0xf]
    %v170 = vld [vmem:[%s3 + $0x38] sm:$0xf]
    %v171 = vld [vmem:[%s3 + $0x3c] sm:$0xf]
    %v172 = vld [vmem:[%s5] sm:$0xf]
    %v173 = vld [vmem:[%s5 + $0x4] sm:$0xf]
    %v174 = vld [vmem:[%s5 + $0x8] sm:$0xf]
    %v175 = vld [vmem:[%s5 + $0xc] sm:$0xf]
    %v176 = vld [vmem:[%s5 + $0x10] sm:$0xf]
    %v177 = vld [vmem:[%s5 + $0x14] sm:$0xf]
    %v178 = vld [vmem:[%s5 + $0x18] sm:$0xf]
    %v179 = vld [vmem:[%s5 + $0x1c] sm:$0xf]
    %v180 = vld [vmem:[%s5 + $0x20] sm:$0xf]
    %v181 = vld [vmem:[%s5 + $0x24] sm:$0xf]
    %v182 = vld [vmem:[%s5 + $0x28] sm:$0xf]
    %v183 = vld [vmem:[%s5 + $0x2c] sm:$0xf]
    %v184 = vld [vmem:[%s5 + $0x30] sm:$0xf]
    %v185 = vld [vmem:[%s5 + $0x34] sm:$0xf]
    %v186 = vld [vmem:[%s5 + $0x38] sm:$0xf]
    %v187 = vld [vmem:[%s5 + $0x3c] sm:$0xf]
    %v188 = vld [vmem:[%s2] sm:$0x1]
    %v189 = vld [vmem:[%s4] sm:$0x1]
    %v190 = vld [vmem:[%s6] sm:$0x1]
    %v191 = vld [vmem:[#allocation2] sm:$0xff]
    %v192 = vld [vmem:[#allocation2 + $0x8] sm:$0xff]
    %v193 = vld [vmem:[#allocation2 + $0x10] sm:$0xff]
    %v194 = vld [vmem:[#allocation2 + $0x18] sm:$0xff]
    %v195 = vld [vmem:[#allocation2 + $0x20] sm:$0xff]
    %v196 = vld [vmem:[#allocation2 + $0x28] sm:$0xff]
    %v197 = vld [vmem:[#allocation2 + $0x30] sm:$0xff]
    %v198 = vpack.c.bf16 %v191, %v191
    %v199 = vpack.c.bf16 %v192, %v192
    %v200 = vpack.c.bf16 %v193, %v193
    %v201 = vpack.c.bf16 %v194, %v194
    %v202 = vpack.c.bf16 %v195, %v195
    %v203 = vpack.c.bf16 %v196, %v196
    %v204 = vpack.c.bf16 %v197, %v197
    %v206 = vperm.slane %v188, 0
    %v306 = vunpack.c.l.b16 %v58
    %v307 = vunpack.c.l.b16 %v59
    %v308 = vunpack.c.l.b16 %v60
    %v309 = vunpack.c.l.b16 %v61
    %v310 = vunpack.c.l.b16 %v62
    %v311 = vunpack.c.l.b16 %v63
    %v312 = vunpack.c.l.b16 %v64
    %v313 = vunpack.c.l.b16 %v65
    %v314 = vunpack.c.l.b16 %v66
    %v315 = vunpack.c.l.b16 %v67
    %v316 = vunpack.c.l.b16 %v68
    %v317 = vunpack.c.l.b16 %v69
    %v318 = vunpack.c.l.b16 %v70
    %v319 = vunpack.c.l.b16 %v71
    %v320 = vunpack.c.l.b16 %v72
    %v321 = vunpack.c.l.b16 %v73
    %v322 = vunpack.c.l.b16 %v74
    %v323 = vunpack.c.l.b16 %v75
    %v324 = vunpack.c.l.b16 %v76
    %v325 = vunpack.c.l.b16 %v77
    %v326 = vunpack.c.l.b16 %v78
    %v327 = vunpack.c.l.b16 %v79
    %v328 = vunpack.c.l.b16 %v80
    %v329 = vunpack.c.l.b16 %v81
    %v330 = vunpack.c.l.b16 %v82
    %v331 = vunpack.c.l.b16 %v83
    %v332 = vunpack.c.l.b16 %v84
    %v333 = vunpack.c.l.b16 %v85
    %v334 = vunpack.c.l.b16 %v86
    %v335 = vunpack.c.l.b16 %v87
    %v336 = vunpack.c.l.b16 %v88
    %v337 = vunpack.c.l.b16 %v89
    %v338 = vunpack.c.l.b16 %v90
    %v339 = vunpack.c.l.b16 %v91
    %v340 = vunpack.c.l.b16 %v92
    %v341 = vunpack.c.l.b16 %v93
    %v342 = vunpack.c.l.b16 %v94
    %v343 = vunpack.c.l.b16 %v95
    %v344 = vunpack.c.l.b16 %v96
    %v345 = vunpack.c.l.b16 %v97
    %v346 = vunpack.c.l.b16 %v98
    %v347 = vunpack.c.l.b16 %v99
    %v348 = vunpack.c.l.b16 %v100
    %v349 = vunpack.c.l.b16 %v101
    %v350 = vunpack.c.l.b16 %v102
    %v351 = vunpack.c.l.b16 %v103
    %v352 = vunpack.c.l.b16 %v104
    %v353 = vunpack.c.l.b16 %v105
    %v354 = vunpack.c.l.b16 %v106
    %v355 = vunpack.c.l.b16 %v107
    %v356 = vunpack.c.l.b16 %v108
    %v357 = vunpack.c.l.b16 %v109
    %v358 = vunpack.c.l.b16 %v110
    %v359 = vunpack.c.l.b16 %v111
    %v360 = vunpack.c.l.b16 %v112
    %v361 = vunpack.c.l.b16 %v113
    %v362 = vunpack.c.l.b16 %v114
    %v363 = vunpack.c.l.b16 %v115
    %v364 = vunpack.c.l.b16 %v116
    %v365 = vunpack.c.l.b16 %v117
    %v366 = vunpack.c.l.b16 %v118
    %v367 = vunpack.c.l.b16 %v119
    %v368 = vunpack.c.l.b16 %v120
    %v369 = vunpack.c.l.b16 %v121
    %v370 = vunpack.c.l.b16 %v122
    %v371 = vunpack.c.l.b16 %v123
    %v372 = vunpack.c.l.b16 %v124
    %v373 = vunpack.c.l.b16 %v125
    %v374 = vunpack.c.l.b16 %v126
    %v375 = vunpack.c.l.b16 %v127
    %v376 = vunpack.c.l.b16 %v128
    %v377 = vunpack.c.l.b16 %v129
    %v378 = vunpack.c.l.b16 %v130
    %v379 = vunpack.c.l.b16 %v131
    %v380 = vunpack.c.l.b16 %v132
    %v381 = vunpack.c.l.b16 %v133
    %v382 = vunpack.c.l.b16 %v134
    %v383 = vunpack.c.l.b16 %v135
    %v384 = vunpack.c.l.b16 %v136
    %v385 = vunpack.c.l.b16 %v137
    %v386 = vunpack.c.l.b16 %v138
    %v387 = vunpack.c.l.b16 %v139
    %v388 = vunpack.c.l.b16 %v140
    %v389 = vunpack.c.l.b16 %v141
    %v390 = vunpack.c.l.b16 %v142
    %v391 = vunpack.c.l.b16 %v143
    %v392 = vunpack.c.l.b16 %v144
    %v393 = vunpack.c.l.b16 %v145
    %v394 = vunpack.c.l.b16 %v146
    %v395 = vunpack.c.l.b16 %v147
    %v396 = vunpack.c.l.b16 %v148
    %v397 = vunpack.c.l.b16 %v149
    %v398 = vunpack.c.l.b16 %v150
    %v399 = vunpack.c.l.b16 %v151
    %v400 = vunpack.c.l.b16 %v152
    %v401 = vunpack.c.l.b16 %v153
    %v402 = vunpack.c.l.b16 %v154
    %v403 = vunpack.c.l.b16 %v155
    %v404 = vpack.c.b16 %v307, %v306
    %v405 = vpack.c.b16 %v309, %v308
    %v406 = vpack.c.b16 %v311, %v310
    %v407 = vpack.c.b16 %v313, %v312
    %v408 = vpack.c.b16 %v315, %v314
    %v409 = vpack.c.b16 %v317, %v316
    %v410 = vpack.c.b16 %v319, %v318
    %v411 = vpack.c.b16 %v321, %v320
    %v412 = vpack.c.b16 %v323, %v322
    %v413 = vpack.c.b16 %v325, %v324
    %v414 = vpack.c.b16 %v327, %v326
    %v415 = vpack.c.b16 %v329, %v328
    %v416 = vpack.c.b16 %v331, %v330
    %v417 = vpack.c.b16 %v333, %v332
    %v418 = vpack.c.b16 %v335, %v334
    %v419 = vpack.c.b16 %v337, %v336
    %v420 = vpack.c.b16 %v339, %v338
    %v421 = vpack.c.b16 %v341, %v340
    %v422 = vpack.c.b16 %v343, %v342
    %v423 = vpack.c.b16 %v345, %v344
    %v424 = vpack.c.b16 %v347, %v346
    %v425 = vpack.c.b16 %v349, %v348
    %v426 = vpack.c.b16 %v351, %v350
    %v427 = vpack.c.b16 %v353, %v352
    %v428 = vpack.c.b16 %v355, %v354
    %v429 = vpack.c.b16 %v357, %v356
    %v430 = vpack.c.b16 %v359, %v358
    %v431 = vpack.c.b16 %v361, %v360
    %v432 = vpack.c.b16 %v363, %v362
    %v433 = vpack.c.b16 %v365, %v364
    %v434 = vpack.c.b16 %v367, %v366
    %v435 = vpack.c.b16 %v369, %v368
    %v436 = vpack.c.b16 %v371, %v370
    %v437 = vpack.c.b16 %v373, %v372
    %v438 = vpack.c.b16 %v375, %v374
    %v439 = vpack.c.b16 %v377, %v376
    %v440 = vpack.c.b16 %v379, %v378
    %v441 = vpack.c.b16 %v381, %v380
    %v442 = vpack.c.b16 %v383, %v382
    %v443 = vpack.c.b16 %v385, %v384
    %v444 = vpack.c.b16 %v387, %v386
    %v445 = vpack.c.b16 %v389, %v388
    %v446 = vpack.c.b16 %v391, %v390
    %v447 = vpack.c.b16 %v393, %v392
    %v448 = vpack.c.b16 %v395, %v394
    %v449 = vpack.c.b16 %v397, %v396
    %v450 = vpack.c.b16 %v399, %v398
    %v451 = vpack.c.b16 %v401, %v400
    %v452 = vpack.c.b16 %v403, %v402
    %vm502 = vcmask 130048
    %v504 = vsel %vm502, %v204, 0
    %506 = vmatpush.bf16.msra.mxu0 %v411
    %507 = vmatpush.bf16.msra.mxu0 %v410
    %508 = vmatpush.bf16.msra.mxu0 %v409
    %509 = vmatpush.bf16.msra.mxu0 %v408
    %510 = vmatpush.bf16.msra.mxu0 %v407
    %511 = vmatpush.bf16.msra.mxu0 %v406
    %512 = vmatpush.bf16.msra.mxu0 %v405
    %513 = vmatpush.bf16.msra.mxu0 %v404
    %514 = vmatmul.bf16.gmra.mxu0 %v198
    %v515 = vpop.f32.mrf.mxu0
    %v516 = vadd.f32 %v206, %v515
    %v517 = vpop.f32.mrf.mxu0
    %518 = vdwg.mxu0
    %519 = vmatpush.bf16.msra.mxu0 %v419
    %520 = vmatpush.bf16.msra.mxu0 %v418
    %521 = vmatpush.bf16.msra.mxu0 %v417
    %522 = vmatpush.bf16.msra.mxu0 %v416
    %523 = vmatpush.bf16.msra.mxu0 %v415
    %524 = vmatpush.bf16.msra.mxu0 %v414
    %525 = vmatpush.bf16.msra.mxu0 %v413
    %526 = vmatpush.bf16.msra.mxu0 %v412
    %527 = vmatmul.bf16.gmra.mxu0 %v199
    %v528 = vpop.f32.mrf.mxu0
    %v529 = vadd.f32 %v516, %v528
    %v530 = vpop.f32.mrf.mxu0
    %531 = vdwg.mxu0
    %532 = vmatpush.bf16.msra.mxu0 %v427
    %533 = vmatpush.bf16.msra.mxu0 %v426
    %534 = vmatpush.bf16.msra.mxu0 %v425
    %535 = vmatpush.bf16.msra.mxu0 %v424
    %536 = vmatpush.bf16.msra.mxu0 %v423
    %537 = vmatpush.bf16.msra.mxu0 %v422
    %538 = vmatpush.bf16.msra.mxu0 %v421
    %539 = vmatpush.bf16.msra.mxu0 %v420
    %540 = vmatmul.bf16.gmra.mxu0 %v200
    %v541 = vpop.f32.mrf.mxu0
    %v542 = vadd.f32 %v529, %v541
    %v543 = vpop.f32.mrf.mxu0
    %544 = vdwg.mxu0
    %545 = vmatpush.bf16.msra.mxu0 %v435
    %546 = vmatpush.bf16.msra.mxu0 %v434
    %547 = vmatpush.bf16.msra.mxu0 %v433
    %548 = vmatpush.bf16.msra.mxu0 %v432
    %549 = vmatpush.bf16.msra.mxu0 %v431
    %550 = vmatpush.bf16.msra.mxu0 %v430
    %551 = vmatpush.bf16.msra.mxu0 %v429
    %552 = vmatpush.bf16.msra.mxu0 %v428
    %553 = vmatmul.bf16.gmra.mxu0 %v201
    %v554 = vpop.f32.mrf.mxu0
    %v555 = vadd.f32 %v542, %v554
    %v556 = vpop.f32.mrf.mxu0
    %557 = vdwg.mxu0
    %558 = vmatpush.bf16.msra.mxu0 %v443
    %559 = vmatpush.bf16.msra.mxu0 %v442
    %560 = vmatpush.bf16.msra.mxu0 %v441
    %561 = vmatpush.bf16.msra.mxu0 %v440
    %562 = vmatpush.bf16.msra.mxu0 %v439
    %563 = vmatpush.bf16.msra.mxu0 %v438
    %564 = vmatpush.bf16.msra.mxu0 %v437
    %565 = vmatpush.bf16.msra.mxu0 %v436
    %566 = vmatmul.bf16.gmra.mxu0 %v202
    %v567 = vpop.f32.mrf.mxu0
    %v568 = vadd.f32 %v555, %v567
    %v569 = vpop.f32.mrf.mxu0
    %570 = vdwg.mxu0
    %571 = vmatpush.bf16.msra.mxu0 %v451
    %572 = vmatpush.bf16.msra.mxu0 %v450
    %573 = vmatpush.bf16.msra.mxu0 %v449
    %574 = vmatpush.bf16.msra.mxu0 %v448
    %575 = vmatpush.bf16.msra.mxu0 %v447
    %576 = vmatpush.bf16.msra.mxu0 %v446
    %577 = vmatpush.bf16.msra.mxu0 %v445
    %578 = vmatpush.bf16.msra.mxu0 %v444
    %579 = vmatmul.bf16.gmra.mxu0 %v203
    %v580 = vpop.f32.mrf.mxu0
    %v581 = vadd.f32 %v568, %v580
    %v582 = vpop.f32.mrf.mxu0
    %583 = vdwg.mxu0
    %584 = vmatpush.bf16.msra.mxu0 0
    %585 = vmatpush.bf16.msra.mxu0 0
    %586 = vmatpush.bf16.msra.mxu0 0
    %587 = vmatpush.bf16.msra.mxu0 0
    %588 = vmatpush.bf16.msra.mxu0 0
    %589 = vmatpush.bf16.msra.mxu0 0
    %590 = vmatpush.bf16.msra.mxu0 0
    %591 = vmatpush.bf16.msra.mxu0 %v452
    %592 = vmatmul.bf16.gmra.mxu0 %v504
    %v593 = vpop.f32.mrf.mxu0
    %v594 = vadd.f32 %v581, %v593
    %v595 = vpop.f32.mrf.mxu0
    %596 = vdwg.mxu0
    %v597 = vmax.f32 %v594, 0.0
    %v598 = vpack.c.bf16 %v597, %v597
    %v600 = vperm.slane %v189, 0
    %v618 = vunpack.c.l.b16 %v156
    %v619 = vunpack.c.l.b16 %v157
    %v620 = vunpack.c.l.b16 %v158
    %v621 = vunpack.c.l.b16 %v159
    %v622 = vunpack.c.l.b16 %v160
    %v623 = vunpack.c.l.b16 %v161
    %v624 = vunpack.c.l.b16 %v162
    %v625 = vunpack.c.l.b16 %v163
    %v626 = vunpack.c.l.b16 %v164
    %v627 = vunpack.c.l.b16 %v165
    %v628 = vunpack.c.l.b16 %v166
    %v629 = vunpack.c.l.b16 %v167
    %v630 = vunpack.c.l.b16 %v168
    %v631 = vunpack.c.l.b16 %v169
    %v632 = vunpack.c.l.b16 %v170
    %v633 = vunpack.c.l.b16 %v171
    %v634 = vpack.c.b16 %v619, %v618
    %v635 = vpack.c.b16 %v621, %v620
    %v636 = vpack.c.b16 %v623, %v622
    %v637 = vpack.c.b16 %v625, %v624
    %v638 = vpack.c.b16 %v627, %v626
    %v639 = vpack.c.b16 %v629, %v628
    %v640 = vpack.c.b16 %v631, %v630
    %v641 = vpack.c.b16 %v633, %v632
    %650 = vmatpush.bf16.msra.mxu0 %v641
    %651 = vmatpush.bf16.msra.mxu0 %v640
    %652 = vmatpush.bf16.msra.mxu0 %v639
    %653 = vmatpush.bf16.msra.mxu0 %v638
    %654 = vmatpush.bf16.msra.mxu0 %v637
    %655 = vmatpush.bf16.msra.mxu0 %v636
    %656 = vmatpush.bf16.msra.mxu0 %v635
    %657 = vmatpush.bf16.msra.mxu0 %v634
    %658 = vmatmul.bf16.gmra.mxu0 %v598
    %v659 = vpop.f32.mrf.mxu0
    %v660 = vadd.f32 %v600, %v659
    %v661 = vpop.f32.mrf.mxu0
    %662 = vdwg.mxu0
    %v663 = vmax.f32 %v660, 0.0
    %v664 = vpack.c.bf16 %v663, %v663
    %v666 = vperm.slane %v190, 0
    %v684 = vunpack.c.l.b16 %v172
    %v685 = vunpack.c.l.b16 %v173
    %v686 = vunpack.c.l.b16 %v174
    %v687 = vunpack.c.l.b16 %v175
    %v688 = vunpack.c.l.b16 %v176
    %v689 = vunpack.c.l.b16 %v177
    %v690 = vunpack.c.l.b16 %v178
    %v691 = vunpack.c.l.b16 %v179
    %v692 = vunpack.c.l.b16 %v180
    %v693 = vunpack.c.l.b16 %v181
    %v694 = vunpack.c.l.b16 %v182
    %v695 = vunpack.c.l.b16 %v183
    %v696 = vunpack.c.l.b16 %v184
    %v697 = vunpack.c.l.b16 %v185
    %v698 = vunpack.c.l.b16 %v186
    %v699 = vunpack.c.l.b16 %v187
    %v700 = vpack.c.b16 %v685, %v684
    %v701 = vpack.c.b16 %v687, %v686
    %v702 = vpack.c.b16 %v689, %v688
    %v703 = vpack.c.b16 %v691, %v690
    %v704 = vpack.c.b16 %v693, %v692
    %v705 = vpack.c.b16 %v695, %v694
    %v706 = vpack.c.b16 %v697, %v696
    %v707 = vpack.c.b16 %v699, %v698
    %716 = vmatpush.bf16.msra.mxu0 %v707
    %717 = vmatpush.bf16.msra.mxu0 %v706
    %718 = vmatpush.bf16.msra.mxu0 %v705
    %719 = vmatpush.bf16.msra.mxu0 %v704
    %720 = vmatpush.bf16.msra.mxu0 %v703
    %721 = vmatpush.bf16.msra.mxu0 %v702
    %722 = vmatpush.bf16.msra.mxu0 %v701
    %723 = vmatpush.bf16.msra.mxu0 %v700
    %724 = vmatmul.bf16.gmra.mxu0 %v664
    %v725 = vpop.f32.mrf.mxu0
    %v726 = vadd.f32 %v666, %v725
    %v727 = vpop.f32.mrf.mxu0
    %728 = vdwg.mxu0
    %vm729 = vcmask 80896
    %730 = vst.msk [vmem:[#allocation7] sm:$0xff] %vm729, %v726
    // Predicated region
    $region38: #{tpu_custom_call.1} parent=1 // pred_check
      _
    $region39: #{tpu_custom_call.1} parent=1 // pred_check_branch
      %732 = sbr.rel (0) target = $region41
    $region40: #{tpu_custom_call.1} parent=1 // pred_region
      %734 = vsyncadd [#allocation4], 0
      %s736 = sshll.u32 [#allocation7], 4
      %s737 = int_to_ptr.vmem [resolvable:$true] %s736
      %s738 = sshll.u32 %s7, 4
      %s739 = int_to_ptr.hbm [resolvable:$true] %s738
      %741 = dma.vmem_to_hbm [thread:$0]  %s737, 128, %s739, [#allocation4]
    $region41: #{tpu_custom_call.1} parent=1 // pred_fallthru
      _
    // Predicated region
    $region42: #{tpu_custom_call.1} parent=1 // pred_check
      _
    $region43: #{tpu_custom_call.1} parent=1 // pred_check_branch
      %743 = sbr.rel (0) target = $region45
    $region44: #{tpu_custom_call.1} parent=1 // pred_region
      %745 = dma.done [#allocation4], 128
    $region45: #{tpu_custom_call.1} parent=1 // pred_fallthru
      _
    %746 = vsyncpa [#allocation3], 1
    %747 = vsyncpa [#allocation6], 1
    %748 = vsyncpa [#allocation4], 1

</llo_original>
